<compile_context>
chip_gen: v7x
topology: tpu7x:2x2x1
jax: 0.10.0
libtpu: 0.0.40
codegen_flags: <defaults>
</compile_context>

<pallas_src>
import functools

import jax
import jax.numpy as jnp
from jax import lax
from jax.experimental import pallas as pl
from jax.experimental.pallas import tpu as pltpu


def _decomp_kernel(x_ref, res_ref, mean_ref, *, kernel_size, channels):
    """Moving mean + residual on a lane-dense (Bblk, L*C) block.

    The time axis lives on the flattened lane axis with stride `channels`, so
    every window shift is a lane roll by a multiple of `channels`.
    """
    pad = (kernel_size - 1) // 2
    n = x_ref.shape[-1]
    c = channels
    seq_len = n // c

    xf = x_ref[...].astype(jnp.float32)

    if pad == 0 or seq_len == 1:
        # Window of a single sample (or a single time step): mean == x.
        mean = xf
    else:
        lane = lax.broadcasted_iota(jnp.int32, xf.shape, 1)
        keep_lo = lane >= c          # lanes that are valid after a +1 time-step shift
        keep_hi = lane < (n - c)     # lanes that are valid after a -1 time-step shift

        # acc accumulates sum_{d=-pad..pad} x[clamp(t+d, 0, L-1)] directly.
        # After d loop steps: lo == x[max(t-d, 0)], hi == x[min(t+d, L-1)].
        # Each roll moves one time step; the masked-off boundary lanes keep
        # their previous (already clamped) values, which is exactly the
        # replication padding of the PyTorch module.
        acc = xf
        lo = xf
        hi = xf
        for _ in range(pad):
            lo = jnp.where(keep_lo, pltpu.roll(lo, c, axis=1), lo)
            hi = jnp.where(keep_hi, pltpu.roll(hi, n - c, axis=1), hi)
            acc = acc + lo + hi
        mean = acc * (1.0 / kernel_size)

    mean_ref[...] = mean.astype(mean_ref.dtype)
    res_ref[...] = (xf - mean).astype(res_ref.dtype)


def series_decomp(x, kernel_size):
    """Returns (res, moving_mean), each (B, L, C), matching the PyTorch module."""
    assert kernel_size >= 1 and kernel_size % 2 == 1, (
        "series_decomp expects an odd kernel_size (stride=1 moving average)")
    B, L, C = x.shape
    N = L * C
    itemsize = jnp.dtype(x.dtype).itemsize

    # --- Real VMEM footprint per batch row (lane-padded, fp32 temporaries) ----
    n_lanes = pl.cdiv(N, 128) * 128
    # 2 pipeline buffers for the input block + 2*2 for the two output blocks,
    # plus ~9 fp32/int32-sized in-kernel temporaries (xf, lo, hi, acc, rolled
    # values, iota, masks, mean/res values).
    row_bytes = n_lanes * (6 * itemsize + 9 * 4)

    # --- Generation-aware scoped-VMEM limit (v7x: 64 MiB/TC, v5e/v6e: 128) ----
    try:
        vmem_cap = int(pltpu.get_tpu_info().vmem_capacity_bytes)
    except Exception:  # conservative default if the query is unavailable
        vmem_cap = 64 * 1024 * 1024
    vmem_limit = min(int(0.6 * vmem_cap), 96 * 1024 * 1024)

    # --- Batch-block sizing against the budget, then shape the grid ----------
    block_budget = vmem_limit // 2          # headroom for compiler scratch
    bblk_budget = max(1, min(B, block_budget // row_bytes))
    bblk = bblk_budget
    if B >= 2:
        # Keep >=2 grid steps (both TensorCores) / ~4 steps (pipelining) once
        # there is real work, without shrinking blocks below ~256 KiB per step
        # (per-step overhead is ~0.35 us).
        target_steps = 4 if B >= 4 else 2
        min_rows = max(1, (256 * 1024) // row_bytes)
        bblk = min(bblk, max(min_rows, pl.cdiv(B, target_steps)))
    if bblk < B:
        # Prefer sublane-aligned (multiple-of-8 row) partial blocks when the
        # VMEM budget allows; otherwise keep whatever fits.
        aligned = ((bblk + 7) // 8) * 8
        if aligned <= bblk_budget:
            bblk = min(B, aligned)
    bblk = max(1, min(bblk, B))
    grid = (pl.cdiv(B, bblk),)

    # Lane-dense view: the contiguous (L, C) -> (L*C,) merge is metadata-only.
    x_flat = x.reshape(B, N)

    kernel = functools.partial(_decomp_kernel, kernel_size=kernel_size, channels=C)
    spec = pl.BlockSpec((bblk, N), lambda i: (i, 0))

    res, mean = pl.pallas_call(
        kernel,
        out_shape=(
            jax.ShapeDtypeStruct((B, N), x.dtype),  # res
            jax.ShapeDtypeStruct((B, N), x.dtype),  # moving_mean
        ),
        grid_spec=pltpu.PrefetchScalarGridSpec(
            num_scalar_prefetch=0,
            grid=grid,
            in_specs=[spec],
            out_specs=[spec, spec],
        ),
        compiler_params=pltpu.CompilerParams(
            dimension_semantics=("parallel",),
            vmem_limit_bytes=vmem_limit,
        ),
    )(x_flat)
    return res.reshape(B, L, C), mean.reshape(B, L, C)


def _reference(x, kernel_size):
    """Pure-JAX reference mirroring the PyTorch module exactly (fp32 math)."""
    pad = (kernel_size - 1) // 2
    xf = x.astype(jnp.float32)
    L = x.shape[1]
    if pad == 0:
        mean = xf
    else:
        front = jnp.repeat(xf[:, :1, :], pad, axis=1)
        end = jnp.repeat(xf[:, -1:, :], pad, axis=1)
        xpad = jnp.concatenate([front, xf, end], axis=1)
        windows = jnp.stack(
            [xpad[:, i : i + L, :] for i in range(kernel_size)], axis=0)
        mean = jnp.mean(windows, axis=0)
    return xf - mean, mean


if __name__ == "__main__":
    key = jax.random.PRNGKey(0)
    # (B, L, C, kernel_size, dtype, tol) -- exercises the DLinear default k=25,
    # a small window, a window longer than the series, and bf16 I/O at a
    # DLinear-realistic sequence length.
    cases = [
        (2, 96, 8, 25, jnp.float32, 1e-5),
        (2, 16, 4, 5, jnp.float32, 1e-5),
        (2, 16, 8, 25, jnp.float32, 1e-5),
        (2, 336, 8, 25, jnp.bfloat16, 5e-2),
    ]
    for (B, L, C, k, dtype, tol) in cases:
        key, sub = jax.random.split(key)
        x = jax.random.normal(sub, (B, L, C), dtype=jnp.float32).astype(dtype)

        res, mean = series_decomp(x, k)
        res = jax.block_until_ready(res)
        mean = jax.block_until_ready(mean)

        res_ref, mean_ref = _reference(x, k)
        assert res.shape == (B, L, C) and mean.shape == (B, L, C)
        assert jnp.allclose(mean.astype(jnp.float32), mean_ref, atol=tol, rtol=tol), (
            "mean mismatch", B, L, C, k, dtype)
        assert jnp.allclose(res.astype(jnp.float32), res_ref, atol=tol, rtol=tol), (
            "res mismatch", B, L, C, k, dtype)

    print("KERNEL_OK")
</pallas_src>

<mosaic_0001>
module attributes {stable_mosaic.version = 11 : i64} {
  func.func @_decomp_kernel(%arg0: i32, %arg1: memref<2x768xf32, #tpu.memory_space<vmem>>, %arg2: memref<2x768xf32, #tpu.memory_space<vmem>>, %arg3: memref<2x768xf32, #tpu.memory_space<vmem>>) attributes {dimension_semantics = [#tpu.dimension_semantics<parallel>], iteration_bounds = array<i64: 1>, scalar_prefetch = 0 : i64, scratch_operands = 0 : i64, tpu.core_type = #tpu.core_type<tc>, window_params = [{transform_indices = @transform_0, window_bounds = array<i64: 2, 768>}, {transform_indices = @transform_1, window_bounds = array<i64: 2, 768>}, {transform_indices = @transform_2, window_bounds = array<i64: 2, 768>}]} {
    %c0 = arith.constant 0 : index
    %c0_0 = arith.constant 0 : index
    %0 = vector.load %arg1[%c0, %c0_0] : memref<2x768xf32, #tpu.memory_space<vmem>>, vector<2x768xf32>
    %1 = tpu.iota {dimensions = array<i32: 1>} : vector<2x768xi32>
    %c8_i32 = arith.constant 8 : i32
    %2 = vector.broadcast %c8_i32 : i32 to vector<2x768xi32>
    %3 = arith.cmpi sge, %1, %2 : vector<2x768xi32>
    %c760_i32 = arith.constant 760 : i32
    %4 = vector.broadcast %c760_i32 : i32 to vector<2x768xi32>
    %5 = arith.cmpi slt, %1, %4 : vector<2x768xi32>
    %c8_i32_1 = arith.constant 8 : i32
    %6 = tpu.dynamic_rotate %0 by %c8_i32_1 dim 1 : vector<2x768xf32>, i32 -> vector<2x768xf32>
    %7 = arith.select %3, %6, %0 : vector<2x768xi1>, vector<2x768xf32>
    %c760_i32_2 = arith.constant 760 : i32
    %8 = tpu.dynamic_rotate %0 by %c760_i32_2 dim 1 : vector<2x768xf32>, i32 -> vector<2x768xf32>
    %9 = arith.select %5, %8, %0 : vector<2x768xi1>, vector<2x768xf32>
    %10 = arith.addf %0, %7 : vector<2x768xf32>
    %11 = arith.addf %10, %9 : vector<2x768xf32>
    %c8_i32_3 = arith.constant 8 : i32
    %12 = tpu.dynamic_rotate %7 by %c8_i32_3 dim 1 : vector<2x768xf32>, i32 -> vector<2x768xf32>
    %13 = arith.select %3, %12, %7 : vector<2x768xi1>, vector<2x768xf32>
    %c760_i32_4 = arith.constant 760 : i32
    %14 = tpu.dynamic_rotate %9 by %c760_i32_4 dim 1 : vector<2x768xf32>, i32 -> vector<2x768xf32>
    %15 = arith.select %5, %14, %9 : vector<2x768xi1>, vector<2x768xf32>
    %16 = arith.addf %11, %13 : vector<2x768xf32>
    %17 = arith.addf %16, %15 : vector<2x768xf32>
    %c8_i32_5 = arith.constant 8 : i32
    %18 = tpu.dynamic_rotate %13 by %c8_i32_5 dim 1 : vector<2x768xf32>, i32 -> vector<2x768xf32>
    %19 = arith.select %3, %18, %13 : vector<2x768xi1>, vector<2x768xf32>
    %c760_i32_6 = arith.constant 760 : i32
    %20 = tpu.dynamic_rotate %15 by %c760_i32_6 dim 1 : vector<2x768xf32>, i32 -> vector<2x768xf32>
    %21 = arith.select %5, %20, %15 : vector<2x768xi1>, vector<2x768xf32>
    %22 = arith.addf %17, %19 : vector<2x768xf32>
    %23 = arith.addf %22, %21 : vector<2x768xf32>
    %c8_i32_7 = arith.constant 8 : i32
    %24 = tpu.dynamic_rotate %19 by %c8_i32_7 dim 1 : vector<2x768xf32>, i32 -> vector<2x768xf32>
    %25 = arith.select %3, %24, %19 : vector<2x768xi1>, vector<2x768xf32>
    %c760_i32_8 = arith.constant 760 : i32
    %26 = tpu.dynamic_rotate %21 by %c760_i32_8 dim 1 : vector<2x768xf32>, i32 -> vector<2x768xf32>
    %27 = arith.select %5, %26, %21 : vector<2x768xi1>, vector<2x768xf32>
    %28 = arith.addf %23, %25 : vector<2x768xf32>
    %29 = arith.addf %28, %27 : vector<2x768xf32>
    %c8_i32_9 = arith.constant 8 : i32
    %30 = tpu.dynamic_rotate %25 by %c8_i32_9 dim 1 : vector<2x768xf32>, i32 -> vector<2x768xf32>
    %31 = arith.select %3, %30, %25 : vector<2x768xi1>, vector<2x768xf32>
    %c760_i32_10 = arith.constant 760 : i32
    %32 = tpu.dynamic_rotate %27 by %c760_i32_10 dim 1 : vector<2x768xf32>, i32 -> vector<2x768xf32>
    %33 = arith.select %5, %32, %27 : vector<2x768xi1>, vector<2x768xf32>
    %34 = arith.addf %29, %31 : vector<2x768xf32>
    %35 = arith.addf %34, %33 : vector<2x768xf32>
    %c8_i32_11 = arith.constant 8 : i32
    %36 = tpu.dynamic_rotate %31 by %c8_i32_11 dim 1 : vector<2x768xf32>, i32 -> vector<2x768xf32>
    %37 = arith.select %3, %36, %31 : vector<2x768xi1>, vector<2x768xf32>
    %c760_i32_12 = arith.constant 760 : i32
    %38 = tpu.dynamic_rotate %33 by %c760_i32_12 dim 1 : vector<2x768xf32>, i32 -> vector<2x768xf32>
    %39 = arith.select %5, %38, %33 : vector<2x768xi1>, vector<2x768xf32>
    %40 = arith.addf %35, %37 : vector<2x768xf32>
    %41 = arith.addf %40, %39 : vector<2x768xf32>
    %c8_i32_13 = arith.constant 8 : i32
    %42 = tpu.dynamic_rotate %37 by %c8_i32_13 dim 1 : vector<2x768xf32>, i32 -> vector<2x768xf32>
    %43 = arith.select %3, %42, %37 : vector<2x768xi1>, vector<2x768xf32>
    %c760_i32_14 = arith.constant 760 : i32
    %44 = tpu.dynamic_rotate %39 by %c760_i32_14 dim 1 : vector<2x768xf32>, i32 -> vector<2x768xf32>
    %45 = arith.select %5, %44, %39 : vector<2x768xi1>, vector<2x768xf32>
    %46 = arith.addf %41, %43 : vector<2x768xf32>
    %47 = arith.addf %46, %45 : vector<2x768xf32>
    %c8_i32_15 = arith.constant 8 : i32
    %48 = tpu.dynamic_rotate %43 by %c8_i32_15 dim 1 : vector<2x768xf32>, i32 -> vector<2x768xf32>
    %49 = arith.select %3, %48, %43 : vector<2x768xi1>, vector<2x768xf32>
    %c760_i32_16 = arith.constant 760 : i32
    %50 = tpu.dynamic_rotate %45 by %c760_i32_16 dim 1 : vector<2x768xf32>, i32 -> vector<2x768xf32>
    %51 = arith.select %5, %50, %45 : vector<2x768xi1>, vector<2x768xf32>
    %52 = arith.addf %47, %49 : vector<2x768xf32>
    %53 = arith.addf %52, %51 : vector<2x768xf32>
    %c8_i32_17 = arith.constant 8 : i32
    %54 = tpu.dynamic_rotate %49 by %c8_i32_17 dim 1 : vector<2x768xf32>, i32 -> vector<2x768xf32>
    %55 = arith.select %3, %54, %49 : vector<2x768xi1>, vector<2x768xf32>
    %c760_i32_18 = arith.constant 760 : i32
    %56 = tpu.dynamic_rotate %51 by %c760_i32_18 dim 1 : vector<2x768xf32>, i32 -> vector<2x768xf32>
    %57 = arith.select %5, %56, %51 : vector<2x768xi1>, vector<2x768xf32>
    %58 = arith.addf %53, %55 : vector<2x768xf32>
    %59 = arith.addf %58, %57 : vector<2x768xf32>
    %c8_i32_19 = arith.constant 8 : i32
    %60 = tpu.dynamic_rotate %55 by %c8_i32_19 dim 1 : vector<2x768xf32>, i32 -> vector<2x768xf32>
    %61 = arith.select %3, %60, %55 : vector<2x768xi1>, vector<2x768xf32>
    %c760_i32_20 = arith.constant 760 : i32
    %62 = tpu.dynamic_rotate %57 by %c760_i32_20 dim 1 : vector<2x768xf32>, i32 -> vector<2x768xf32>
    %63 = arith.select %5, %62, %57 : vector<2x768xi1>, vector<2x768xf32>
    %64 = arith.addf %59, %61 : vector<2x768xf32>
    %65 = arith.addf %64, %63 : vector<2x768xf32>
    %c8_i32_21 = arith.constant 8 : i32
    %66 = tpu.dynamic_rotate %61 by %c8_i32_21 dim 1 : vector<2x768xf32>, i32 -> vector<2x768xf32>
    %67 = arith.select %3, %66, %61 : vector<2x768xi1>, vector<2x768xf32>
    %c760_i32_22 = arith.constant 760 : i32
    %68 = tpu.dynamic_rotate %63 by %c760_i32_22 dim 1 : vector<2x768xf32>, i32 -> vector<2x768xf32>
    %69 = arith.select %5, %68, %63 : vector<2x768xi1>, vector<2x768xf32>
    %70 = arith.addf %65, %67 : vector<2x768xf32>
    %71 = arith.addf %70, %69 : vector<2x768xf32>
    %c8_i32_23 = arith.constant 8 : i32
    %72 = tpu.dynamic_rotate %67 by %c8_i32_23 dim 1 : vector<2x768xf32>, i32 -> vector<2x768xf32>
    %73 = arith.select %3, %72, %67 : vector<2x768xi1>, vector<2x768xf32>
    %c760_i32_24 = arith.constant 760 : i32
    %74 = tpu.dynamic_rotate %69 by %c760_i32_24 dim 1 : vector<2x768xf32>, i32 -> vector<2x768xf32>
    %75 = arith.select %5, %74, %69 : vector<2x768xi1>, vector<2x768xf32>
    %76 = arith.addf %71, %73 : vector<2x768xf32>
    %77 = arith.addf %76, %75 : vector<2x768xf32>
    %cst = arith.constant 4.000000e-02 : f32
    %78 = vector.broadcast %cst : f32 to vector<2x768xf32>
    %79 = arith.mulf %77, %78 : vector<2x768xf32>
    %c0_25 = arith.constant 0 : index
    %c0_26 = arith.constant 0 : index
    %80 = vector.load %arg3[%c0_25, %c0_26] : memref<2x768xf32, #tpu.memory_space<vmem>>, vector<2x768xf32>
    tpu.vector_store %arg3[%c0_25, %c0_26], %79 {strides = array<i32>} : memref<2x768xf32, #tpu.memory_space<vmem>>, vector<2x768xf32>,
    %81 = arith.subf %0, %79 : vector<2x768xf32>
    %c0_27 = arith.constant 0 : index
    %c0_28 = arith.constant 0 : index
    %82 = vector.load %arg2[%c0_27, %c0_28] : memref<2x768xf32, #tpu.memory_space<vmem>>, vector<2x768xf32>
    tpu.vector_store %arg2[%c0_27, %c0_28], %81 {strides = array<i32>} : memref<2x768xf32, #tpu.memory_space<vmem>>, vector<2x768xf32>,
    return
  }
  func.func @transform_0(%arg0: i32) -> (i32, i32) {
    %c0_i32 = arith.constant 0 : i32
    %c0_i32_0 = arith.constant 0 : i32
    return %arg0, %c0_i32 : i32, i32
  }
  func.func @transform_1(%arg0: i32) -> (i32, i32) {
    %c0_i32 = arith.constant 0 : i32
    %c0_i32_0 = arith.constant 0 : i32
    return %arg0, %c0_i32 : i32, i32
  }
  func.func @transform_2(%arg0: i32) -> (i32, i32) {
    %c0_i32 = arith.constant 0 : i32
    %c0_i32_0 = arith.constant 0 : i32
    return %arg0, %c0_i32 : i32, i32
  }
}

</mosaic_0001>

<llo_original>
// kernel: tpu_custom_call.1
$region0: #{tpu_custom_call.1}
  #allocation0 [shape = 'u32[]', space=smem, size = 0x4, offset = 0x4, fixed_abs, tag = 'smem constant byte address 0x4 - core index']
  #allocation1 [shape = 'u32[144,128]{1,0:T(1,128)}', space=vmem, size = 0x12000, scoped, tag = 'internal scratch']
  %s0 = inlined_call_operand.hbm [shape: f32[2,768], index: 0, kind: input, shape index: {}]
  %s1 = inlined_call_operand.hbm [shape: f32[2,768], index: 1, kind: output, shape index: {0}]
  %s2 = inlined_call_operand.hbm [shape: f32[2,768], index: 2, kind: output, shape index: {1}]
  %3 = xla_tuple %s1, %s2
  %s4 = sld [smem:[#allocation0]]
  $region26: #{tpu_custom_call.1} parent=0
    _
  %s6 = ssub.s32 1, %s4
  %s7 = scalar_select 0, %s6, %s4
  $region1: #{tpu_custom_call.1} parent=0
    #allocation2 [shape = 'u8[6144]{0}', space=vmem, size = 0x1800, scoped, tag = 'input window, operand 0, single buffered']
    #allocation3 [shape = 's32[1]{0}', space=sflag, size = 0x4, scoped, tag = 'scoped memory for tpu_custom_call.1']
    #allocation4 [shape = 's32[1]{0}', space=sflag, size = 0x4, scoped, tag = 'scoped memory for tpu_custom_call.1']
    #allocation5 [shape = 'u8[6144]{0}', space=vmem, size = 0x1800, scoped, tag = 'output window, operand 0, single buffered']
    #allocation6 [shape = 'u8[6144]{0}', space=vmem, size = 0x1800, scoped, tag = 'output window, operand 1, single buffered']
    #allocation7 [shape = 's32[1]{0}', space=sflag, size = 0x4, scoped, tag = 'scoped memory for tpu_custom_call.1']
    %8 = vsyncpa [#allocation3], 0
    %9 = vsyncpa [#allocation4], 0
    %10 = vsyncpa [#allocation7], 0
    // Predicated region
    $region2: #{tpu_custom_call.1} parent=1 // pred_check
      _
    $region3: #{tpu_custom_call.1} parent=1 // pred_check_branch
      %12 = sbr.rel (0) target = $region5
    $region4: #{tpu_custom_call.1} parent=1 // pred_region
      %s14 = ssub.s32 192, 192
      %15 = vsyncadd [#allocation3], %s14
      %s17 = sshll.u32 [#allocation2], 4
      %s18 = int_to_ptr.vmem [resolvable:$true] %s17
      %20 = dma.hbm_to_vmem [thread:$0]  %s0, 192, %s18, [#allocation3]
    $region5: #{tpu_custom_call.1} parent=1 // pred_fallthru
      _
    // Predicated region
    $region6: #{tpu_custom_call.1} parent=1 // pred_check
      _
    $region7: #{tpu_custom_call.1} parent=1 // pred_check_branch
      %22 = sbr.rel (0) target = $region9
    $region8: #{tpu_custom_call.1} parent=1 // pred_region
      %23 = dma.done [#allocation3], 192
    $region9: #{tpu_custom_call.1} parent=1 // pred_fallthru
      _
    %v24 = vld [vmem:[#allocation2] sm:$0xff]
    %v25 = vld [vmem:[#allocation2 + $0x8] sm:$0xf]
    %v26 = vlaneseq
    %v27 = vand.u32 %v26, 127
    %v28 = vadd.s32 %v27, 128
    %v29 = vadd.s32 %v27, 256
    %v30 = vadd.s32 %v27, 384
    %v31 = vadd.s32 %v27, 512
    %v32 = vadd.s32 %v27, 640
    %vm33 = vcmp.ge.s32.totalorder %v27, 8
    %vm34 = vcmp.ge.s32.totalorder %v28, 8
    %vm35 = vcmp.ge.s32.totalorder %v29, 8
    %vm36 = vcmp.ge.s32.totalorder %v30, 8
    %vm37 = vcmp.ge.s32.totalorder %v31, 8
    %vm38 = vcmp.ge.s32.totalorder %v32, 8
    %vm39 = vcmp.lt.s32.totalorder %v27, 760
    %vm40 = vcmp.lt.s32.totalorder %v28, 760
    %vm41 = vcmp.lt.s32.totalorder %v29, 760
    %vm42 = vcmp.lt.s32.totalorder %v30, 760
    %vm43 = vcmp.lt.s32.totalorder %v31, 760
    %vm44 = vcmp.lt.s32.totalorder %v32, 760
    %v47 = vcombine.high %v24, %v24
    %v49 = vunpack.c.l.s4 1983009808
    %v50 = vunpack.c.0.s8 %v49
    %v51 = vlaneseq
    %v52 = vshrl.u32 %v51, 7
    %v53 = vsub.s32 %v50, %v52
    %v54 = vrot.slane %v24, %v53
    %v56 = vunpack.c.l.s4 1983009808
    %v57 = vunpack.c.0.s8 %v56
    %v58 = vlaneseq
    %v59 = vshrl.u32 %v58, 7
    %v60 = vsub.s32 %v57, %v59
    %v61 = vrot.slane %v47, %v60
    %v62 = vcombine.high %v54, %v54
    %v63 = vcombine.high %v61, %v61
    %v65 = vunpack.c.l.s4 1983009808
    %v66 = vunpack.c.0.s8 %v65
    %v67 = vlaneseq
    %v68 = vshrl.u32 %v67, 7
    %v69 = vsub.s32 %v66, %v68
    %v70 = vrot.slane %v25, %v69
    %v71 = vcombine.high %v70, %v70
    %78 = vrot.lane.b32.xlu0 %v54, 8
    %v79 = vpop.permute.xlu0 %78
    %80 = vrot.lane.b32.xlu0 %v62, 8
    %v81 = vpop.permute.xlu0 %80
    %82 = vrot.lane.b32.xlu0 %v61, 8
    %v83 = vpop.permute.xlu0 %82
    %84 = vrot.lane.b32.xlu0 %v63, 8
    %v85 = vpop.permute.xlu0 %84
    %86 = vrot.lane.b32.xlu0 %v70, 8
    %v87 = vpop.permute.xlu0 %86
    %88 = vrot.lane.b32.xlu0 %v71, 8
    %v89 = vpop.permute.xlu0 %88
    %vm90 = vcmp.lt.s32.totalorder %v27, 8
    %v91 = vsel %vm90, %v87, %v89
    %v92 = vsel %vm90, %v85, %v87
    %v93 = vsel %vm90, %v83, %v85
    %v94 = vsel %vm90, %v81, %v83
    %v95 = vsel %vm90, %v79, %v81
    %v96 = vsel %vm90, %v89, %v79
    %v97 = vsel %vm33, %v96, %v54
    %v98 = vsel %vm34, %v95, %v62
    %v99 = vsel %vm35, %v94, %v61
    %v100 = vsel %vm36, %v93, %v63
    %v101 = vsel %vm37, %v92, %v70
    %v102 = vsel %vm38, %v91, %v71
    %103 = vrot.lane.b32.xlu0 %v54, 120
    %v104 = vpop.permute.xlu0 %103
    %105 = vrot.lane.b32.xlu0 %v62, 120
    %v106 = vpop.permute.xlu0 %105
    %107 = vrot.lane.b32.xlu0 %v61, 120
    %v108 = vpop.permute.xlu0 %107
    %109 = vrot.lane.b32.xlu0 %v63, 120
    %v110 = vpop.permute.xlu0 %109
    %111 = vrot.lane.b32.xlu0 %v70, 120
    %v112 = vpop.permute.xlu0 %111
    %113 = vrot.lane.b32.xlu0 %v71, 120
    %v114 = vpop.permute.xlu0 %113
    %vm115 = vcmp.lt.s32.totalorder %v27, 120
    %v116 = vsel %vm115, %v112, %v114
    %v117 = vsel %vm115, %v110, %v112
    %v118 = vsel %vm115, %v108, %v110
    %v119 = vsel %vm115, %v106, %v108
    %v120 = vsel %vm115, %v104, %v106
    %v121 = vsel %vm115, %v114, %v104
    %v122 = vsel %vm39, %v120, %v54
    %v123 = vsel %vm40, %v119, %v62
    %v124 = vsel %vm41, %v118, %v61
    %v125 = vsel %vm42, %v117, %v63
    %v126 = vsel %vm43, %v116, %v70
    %v127 = vsel %vm44, %v121, %v71
    %v134 = vcombine.low %v97, %v98
    %v135 = vcombine.low %v99, %v100
    %v137 = vunpack.c.l.s4 1983009808
    %v138 = vunpack.c.0.s8 %v137
    %v139 = vlaneseq
    %v140 = vshrl.u32 %v139, 7
    %v141 = vsub.s32 %v138, %v140
    %v142 = vrot.slane %v134, %v141
    %v144 = vunpack.c.l.s4 1983009808
    %v145 = vunpack.c.0.s8 %v144
    %v146 = vlaneseq
    %v147 = vshrl.u32 %v146, 7
    %v148 = vsub.s32 %v145, %v147
    %v149 = vrot.slane %v135, %v148
    %v150 = vcombine.low %v142, %v149
    %v151 = vcombine.low %v101, %v102
    %v153 = vunpack.c.l.s4 1983009808
    %v154 = vunpack.c.0.s8 %v153
    %v155 = vlaneseq
    %v156 = vshrl.u32 %v155, 7
    %v157 = vsub.s32 %v154, %v156
    %v158 = vrot.slane %v151, %v157
    %v161 = vadd.f32 %v24, %v150
    %v162 = vadd.f32 %v25, %v158
    %v169 = vcombine.low %v122, %v123
    %v170 = vcombine.low %v124, %v125
    %v172 = vunpack.c.l.s4 1983009808
    %v173 = vunpack.c.0.s8 %v172
    %v174 = vlaneseq
    %v175 = vshrl.u32 %v174, 7
    %v176 = vsub.s32 %v173, %v175
    %v177 = vrot.slane %v169, %v176
    %v179 = vunpack.c.l.s4 1983009808
    %v180 = vunpack.c.0.s8 %v179
    %v181 = vlaneseq
    %v182 = vshrl.u32 %v181, 7
    %v183 = vsub.s32 %v180, %v182
    %v184 = vrot.slane %v170, %v183
    %v185 = vcombine.low %v177, %v184
    %v186 = vcombine.low %v126, %v127
    %v188 = vunpack.c.l.s4 1983009808
    %v189 = vunpack.c.0.s8 %v188
    %v190 = vlaneseq
    %v191 = vshrl.u32 %v190, 7
    %v192 = vsub.s32 %v189, %v191
    %v193 = vrot.slane %v186, %v192
    %v196 = vadd.f32 %v161, %v185
    %v197 = vadd.f32 %v162, %v193
    %198 = vrot.lane.b32.xlu0 %v97, 8
    %v199 = vpop.permute.xlu0 %198
    %200 = vrot.lane.b32.xlu0 %v98, 8
    %v201 = vpop.permute.xlu0 %200
    %202 = vrot.lane.b32.xlu0 %v99, 8
    %v203 = vpop.permute.xlu0 %202
    %204 = vrot.lane.b32.xlu0 %v100, 8
    %v205 = vpop.permute.xlu0 %204
    %206 = vrot.lane.b32.xlu0 %v101, 8
    %v207 = vpop.permute.xlu0 %206
    %208 = vrot.lane.b32.xlu0 %v102, 8
    %v209 = vpop.permute.xlu0 %208
    %v210 = vsel %vm90, %v207, %v209
    %v211 = vsel %vm90, %v205, %v207
    %v212 = vsel %vm90, %v203, %v205
    %v213 = vsel %vm90, %v201, %v203
    %v214 = vsel %vm90, %v199, %v201
    %v215 = vsel %vm90, %v209, %v199
    %v216 = vsel %vm33, %v215, %v54
    %v217 = vsel %vm34, %v214, %v62
    %v218 = vsel %vm35, %v213, %v61
    %v219 = vsel %vm36, %v212, %v63
    %v220 = vsel %vm37, %v211, %v70
    %v221 = vsel %vm38, %v210, %v71
    %222 = vrot.lane.b32.xlu0 %v122, 120
    %v223 = vpop.permute.xlu0 %222
    %224 = vrot.lane.b32.xlu0 %v123, 120
    %v225 = vpop.permute.xlu0 %224
    %226 = vrot.lane.b32.xlu0 %v124, 120
    %v227 = vpop.permute.xlu0 %226
    %228 = vrot.lane.b32.xlu0 %v125, 120
    %v229 = vpop.permute.xlu0 %228
    %230 = vrot.lane.b32.xlu0 %v126, 120
    %v231 = vpop.permute.xlu0 %230
    %232 = vrot.lane.b32.xlu0 %v127, 120
    %v233 = vpop.permute.xlu0 %232
    %v234 = vsel %vm115, %v231, %v233
    %v235 = vsel %vm115, %v229, %v231
    %v236 = vsel %vm115, %v227, %v229
    %v237 = vsel %vm115, %v225, %v227
    %v238 = vsel %vm115, %v223, %v225
    %v239 = vsel %vm115, %v233, %v223
    %v240 = vsel %vm39, %v238, %v54
    %v241 = vsel %vm40, %v237, %v62
    %v242 = vsel %vm41, %v236, %v61
    %v243 = vsel %vm42, %v235, %v63
    %v244 = vsel %vm43, %v234, %v70
    %v245 = vsel %vm44, %v239, %v71
    %v252 = vcombine.low %v216, %v217
    %v253 = vcombine.low %v218, %v219
    %v255 = vunpack.c.l.s4 1983009808
    %v256 = vunpack.c.0.s8 %v255
    %v257 = vlaneseq
    %v258 = vshrl.u32 %v257, 7
    %v259 = vsub.s32 %v256, %v258
    %v260 = vrot.slane %v252, %v259
    %v262 = vunpack.c.l.s4 1983009808
    %v263 = vunpack.c.0.s8 %v262
    %v264 = vlaneseq
    %v265 = vshrl.u32 %v264, 7
    %v266 = vsub.s32 %v263, %v265
    %v267 = vrot.slane %v253, %v266
    %v268 = vcombine.low %v260, %v267
    %v269 = vcombine.low %v220, %v221
    %v271 = vunpack.c.l.s4 1983009808
    %v272 = vunpack.c.0.s8 %v271
    %v273 = vlaneseq
    %v274 = vshrl.u32 %v273, 7
    %v275 = vsub.s32 %v272, %v274
    %v276 = vrot.slane %v269, %v275
    %v279 = vadd.f32 %v196, %v268
    %v280 = vadd.f32 %v197, %v276
    %v287 = vcombine.low %v240, %v241
    %v288 = vcombine.low %v242, %v243
    %v290 = vunpack.c.l.s4 1983009808
    %v291 = vunpack.c.0.s8 %v290
    %v292 = vlaneseq
    %v293 = vshrl.u32 %v292, 7
    %v294 = vsub.s32 %v291, %v293
    %v295 = vrot.slane %v287, %v294
    %v297 = vunpack.c.l.s4 1983009808
    %v298 = vunpack.c.0.s8 %v297
    %v299 = vlaneseq
    %v300 = vshrl.u32 %v299, 7
    %v301 = vsub.s32 %v298, %v300
    %v302 = vrot.slane %v288, %v301
    %v303 = vcombine.low %v295, %v302
    %v304 = vcombine.low %v244, %v245
    %v306 = vunpack.c.l.s4 1983009808
    %v307 = vunpack.c.0.s8 %v306
    %v308 = vlaneseq
    %v309 = vshrl.u32 %v308, 7
    %v310 = vsub.s32 %v307, %v309
    %v311 = vrot.slane %v304, %v310
    %v314 = vadd.f32 %v279, %v303
    %v315 = vadd.f32 %v280, %v311
    %316 = vrot.lane.b32.xlu0 %v216, 8
    %v317 = vpop.permute.xlu0 %316
    %318 = vrot.lane.b32.xlu0 %v217, 8
    %v319 = vpop.permute.xlu0 %318
    %320 = vrot.lane.b32.xlu0 %v218, 8
    %v321 = vpop.permute.xlu0 %320
    %322 = vrot.lane.b32.xlu0 %v219, 8
    %v323 = vpop.permute.xlu0 %322
    %324 = vrot.lane.b32.xlu0 %v220, 8
    %v325 = vpop.permute.xlu0 %324
    %326 = vrot.lane.b32.xlu0 %v221, 8
    %v327 = vpop.permute.xlu0 %326
    %v328 = vsel %vm90, %v325, %v327
    %v329 = vsel %vm90, %v323, %v325
    %v330 = vsel %vm90, %v321, %v323
    %v331 = vsel %vm90, %v319, %v321
    %v332 = vsel %vm90, %v317, %v319
    %v333 = vsel %vm90, %v327, %v317
    %v334 = vsel %vm33, %v333, %v54
    %v335 = vsel %vm34, %v332, %v62
    %v336 = vsel %vm35, %v331, %v61
    %v337 = vsel %vm36, %v330, %v63
    %v338 = vsel %vm37, %v329, %v70
    %v339 = vsel %vm38, %v328, %v71
    %340 = vrot.lane.b32.xlu0 %v240, 120
    %v341 = vpop.permute.xlu0 %340
    %342 = vrot.lane.b32.xlu0 %v241, 120
    %v343 = vpop.permute.xlu0 %342
    %344 = vrot.lane.b32.xlu0 %v242, 120
    %v345 = vpop.permute.xlu0 %344
    %346 = vrot.lane.b32.xlu0 %v243, 120
    %v347 = vpop.permute.xlu0 %346
    %348 = vrot.lane.b32.xlu0 %v244, 120
    %v349 = vpop.permute.xlu0 %348
    %350 = vrot.lane.b32.xlu0 %v245, 120
    %v351 = vpop.permute.xlu0 %350
    %v352 = vsel %vm115, %v349, %v351
    %v353 = vsel %vm115, %v347, %v349
    %v354 = vsel %vm115, %v345, %v347
    %v355 = vsel %vm115, %v343, %v345
    %v356 = vsel %vm115, %v341, %v343
    %v357 = vsel %vm115, %v351, %v341
    %v358 = vsel %vm39, %v356, %v54
    %v359 = vsel %vm40, %v355, %v62
    %v360 = vsel %vm41, %v354, %v61
    %v361 = vsel %vm42, %v353, %v63
    %v362 = vsel %vm43, %v352, %v70
    %v363 = vsel %vm44, %v357, %v71
    %v370 = vcombine.low %v334, %v335
    %v371 = vcombine.low %v336, %v337
    %v373 = vunpack.c.l.s4 1983009808
    %v374 = vunpack.c.0.s8 %v373
    %v375 = vlaneseq
    %v376 = vshrl.u32 %v375, 7
    %v377 = vsub.s32 %v374, %v376
    %v378 = vrot.slane %v370, %v377
    %v380 = vunpack.c.l.s4 1983009808
    %v381 = vunpack.c.0.s8 %v380
    %v382 = vlaneseq
    %v383 = vshrl.u32 %v382, 7
    %v384 = vsub.s32 %v381, %v383
    %v385 = vrot.slane %v371, %v384
    %v386 = vcombine.low %v378, %v385
    %v387 = vcombine.low %v338, %v339
    %v389 = vunpack.c.l.s4 1983009808
    %v390 = vunpack.c.0.s8 %v389
    %v391 = vlaneseq
    %v392 = vshrl.u32 %v391, 7
    %v393 = vsub.s32 %v390, %v392
    %v394 = vrot.slane %v387, %v393
    %v397 = vadd.f32 %v314, %v386
    %v398 = vadd.f32 %v315, %v394
    %v405 = vcombine.low %v358, %v359
    %v406 = vcombine.low %v360, %v361
    %v408 = vunpack.c.l.s4 1983009808
    %v409 = vunpack.c.0.s8 %v408
    %v410 = vlaneseq
    %v411 = vshrl.u32 %v410, 7
    %v412 = vsub.s32 %v409, %v411
    %v413 = vrot.slane %v405, %v412
    %v415 = vunpack.c.l.s4 1983009808
    %v416 = vunpack.c.0.s8 %v415
    %v417 = vlaneseq
    %v418 = vshrl.u32 %v417, 7
    %v419 = vsub.s32 %v416, %v418
    %v420 = vrot.slane %v406, %v419
    %v421 = vcombine.low %v413, %v420
    %v422 = vcombine.low %v362, %v363
    %v424 = vunpack.c.l.s4 1983009808
    %v425 = vunpack.c.0.s8 %v424
    %v426 = vlaneseq
    %v427 = vshrl.u32 %v426, 7
    %v428 = vsub.s32 %v425, %v427
    %v429 = vrot.slane %v422, %v428
    %v432 = vadd.f32 %v397, %v421
    %v433 = vadd.f32 %v398, %v429
    %434 = vrot.lane.b32.xlu0 %v334, 8
    %v435 = vpop.permute.xlu0 %434
    %436 = vrot.lane.b32.xlu0 %v335, 8
    %v437 = vpop.permute.xlu0 %436
    %438 = vrot.lane.b32.xlu0 %v336, 8
    %v439 = vpop.permute.xlu0 %438
    %440 = vrot.lane.b32.xlu0 %v337, 8
    %v441 = vpop.permute.xlu0 %440
    %442 = vrot.lane.b32.xlu0 %v338, 8
    %v443 = vpop.permute.xlu0 %442
    %444 = vrot.lane.b32.xlu0 %v339, 8
    %v445 = vpop.permute.xlu0 %444
    %v446 = vsel %vm90, %v443, %v445
    %v447 = vsel %vm90, %v441, %v443
    %v448 = vsel %vm90, %v439, %v441
    %v449 = vsel %vm90, %v437, %v439
    %v450 = vsel %vm90, %v435, %v437
    %v451 = vsel %vm90, %v445, %v435
    %v452 = vsel %vm33, %v451, %v54
    %v453 = vsel %vm34, %v450, %v62
    %v454 = vsel %vm35, %v449, %v61
    %v455 = vsel %vm36, %v448, %v63
    %v456 = vsel %vm37, %v447, %v70
    %v457 = vsel %vm38, %v446, %v71
    %458 = vrot.lane.b32.xlu0 %v358, 120
    %v459 = vpop.permute.xlu0 %458
    %460 = vrot.lane.b32.xlu0 %v359, 120
    %v461 = vpop.permute.xlu0 %460
    %462 = vrot.lane.b32.xlu0 %v360, 120
    %v463 = vpop.permute.xlu0 %462
    %464 = vrot.lane.b32.xlu0 %v361, 120
    %v465 = vpop.permute.xlu0 %464
    %466 = vrot.lane.b32.xlu0 %v362, 120
    %v467 = vpop.permute.xlu0 %466
    %468 = vrot.lane.b32.xlu0 %v363, 120
    %v469 = vpop.permute.xlu0 %468
    %v470 = vsel %vm115, %v467, %v469
    %v471 = vsel %vm115, %v465, %v467
    %v472 = vsel %vm115, %v463, %v465
    %v473 = vsel %vm115, %v461, %v463
    %v474 = vsel %vm115, %v459, %v461
    %v475 = vsel %vm115, %v469, %v459
    %v476 = vsel %vm39, %v474, %v54
    %v477 = vsel %vm40, %v473, %v62
    %v478 = vsel %vm41, %v472, %v61
    %v479 = vsel %vm42, %v471, %v63
    %v480 = vsel %vm43, %v470, %v70
    %v481 = vsel %vm44, %v475, %v71
    %v488 = vcombine.low %v452, %v453
    %v489 = vcombine.low %v454, %v455
    %v491 = vunpack.c.l.s4 1983009808
    %v492 = vunpack.c.0.s8 %v491
    %v493 = vlaneseq
    %v494 = vshrl.u32 %v493, 7
    %v495 = vsub.s32 %v492, %v494
    %v496 = vrot.slane %v488, %v495
    %v498 = vunpack.c.l.s4 1983009808
    %v499 = vunpack.c.0.s8 %v498
    %v500 = vlaneseq
    %v501 = vshrl.u32 %v500, 7
    %v502 = vsub.s32 %v499, %v501
    %v503 = vrot.slane %v489, %v502
    %v504 = vcombine.low %v496, %v503
    %v505 = vcombine.low %v456, %v457
    %v507 = vunpack.c.l.s4 1983009808
    %v508 = vunpack.c.0.s8 %v507
    %v509 = vlaneseq
    %v510 = vshrl.u32 %v509, 7
    %v511 = vsub.s32 %v508, %v510
    %v512 = vrot.slane %v505, %v511
    %v515 = vadd.f32 %v432, %v504
    %v516 = vadd.f32 %v433, %v512
    %v523 = vcombine.low %v476, %v477
    %v524 = vcombine.low %v478, %v479
    %v526 = vunpack.c.l.s4 1983009808
    %v527 = vunpack.c.0.s8 %v526
    %v528 = vlaneseq
    %v529 = vshrl.u32 %v528, 7
    %v530 = vsub.s32 %v527, %v529
    %v531 = vrot.slane %v523, %v530
    %v533 = vunpack.c.l.s4 1983009808
    %v534 = vunpack.c.0.s8 %v533
    %v535 = vlaneseq
    %v536 = vshrl.u32 %v535, 7
    %v537 = vsub.s32 %v534, %v536
    %v538 = vrot.slane %v524, %v537
    %v539 = vcombine.low %v531, %v538
    %v540 = vcombine.low %v480, %v481
    %v542 = vunpack.c.l.s4 1983009808
    %v543 = vunpack.c.0.s8 %v542
    %v544 = vlaneseq
    %v545 = vshrl.u32 %v544, 7
    %v546 = vsub.s32 %v543, %v545
    %v547 = vrot.slane %v540, %v546
    %v550 = vadd.f32 %v515, %v539
    %v551 = vadd.f32 %v516, %v547
    %552 = vrot.lane.b32.xlu0 %v452, 8
    %v553 = vpop.permute.xlu0 %552
    %554 = vrot.lane.b32.xlu0 %v453, 8
    %v555 = vpop.permute.xlu0 %554
    %556 = vrot.lane.b32.xlu0 %v454, 8
    %v557 = vpop.permute.xlu0 %556
    %558 = vrot.lane.b32.xlu0 %v455, 8
    %v559 = vpop.permute.xlu0 %558
    %560 = vrot.lane.b32.xlu0 %v456, 8
    %v561 = vpop.permute.xlu0 %560
    %562 = vrot.lane.b32.xlu0 %v457, 8
    %v563 = vpop.permute.xlu0 %562
    %v564 = vsel %vm90, %v561, %v563
    %v565 = vsel %vm90, %v559, %v561
    %v566 = vsel %vm90, %v557, %v559
    %v567 = vsel %vm90, %v555, %v557
    %v568 = vsel %vm90, %v553, %v555
    %v569 = vsel %vm90, %v563, %v553
    %v570 = vsel %vm33, %v569, %v54
    %v571 = vsel %vm34, %v568, %v62
    %v572 = vsel %vm35, %v567, %v61
    %v573 = vsel %vm36, %v566, %v63
    %v574 = vsel %vm37, %v565, %v70
    %v575 = vsel %vm38, %v564, %v71
    %576 = vrot.lane.b32.xlu0 %v476, 120
    %v577 = vpop.permute.xlu0 %576
    %578 = vrot.lane.b32.xlu0 %v477, 120
    %v579 = vpop.permute.xlu0 %578
    %580 = vrot.lane.b32.xlu0 %v478, 120
    %v581 = vpop.permute.xlu0 %580
    %582 = vrot.lane.b32.xlu0 %v479, 120
    %v583 = vpop.permute.xlu0 %582
    %584 = vrot.lane.b32.xlu0 %v480, 120
    %v585 = vpop.permute.xlu0 %584
    %586 = vrot.lane.b32.xlu0 %v481, 120
    %v587 = vpop.permute.xlu0 %586
    %v588 = vsel %vm115, %v585, %v587
    %v589 = vsel %vm115, %v583, %v585
    %v590 = vsel %vm115, %v581, %v583
    %v591 = vsel %vm115, %v579, %v581
    %v592 = vsel %vm115, %v577, %v579
    %v593 = vsel %vm115, %v587, %v577
    %v594 = vsel %vm39, %v592, %v54
    %v595 = vsel %vm40, %v591, %v62
    %v596 = vsel %vm41, %v590, %v61
    %v597 = vsel %vm42, %v589, %v63
    %v598 = vsel %vm43, %v588, %v70
    %v599 = vsel %vm44, %v593, %v71
    %v606 = vcombine.low %v570, %v571
    %v607 = vcombine.low %v572, %v573
    %v609 = vunpack.c.l.s4 1983009808
    %v610 = vunpack.c.0.s8 %v609
    %v611 = vlaneseq
    %v612 = vshrl.u32 %v611, 7
    %v613 = vsub.s32 %v610, %v612
    %v614 = vrot.slane %v606, %v613
    %v616 = vunpack.c.l.s4 1983009808
    %v617 = vunpack.c.0.s8 %v616
    %v618 = vlaneseq
    %v619 = vshrl.u32 %v618, 7
    %v620 = vsub.s32 %v617, %v619
    %v621 = vrot.slane %v607, %v620
    %v622 = vcombine.low %v614, %v621
    %v623 = vcombine.low %v574, %v575
    %v625 = vunpack.c.l.s4 1983009808
    %v626 = vunpack.c.0.s8 %v625
    %v627 = vlaneseq
    %v628 = vshrl.u32 %v627, 7
    %v629 = vsub.s32 %v626, %v628
    %v630 = vrot.slane %v623, %v629
    %v633 = vadd.f32 %v550, %v622
    %v634 = vadd.f32 %v551, %v630
    %v641 = vcombine.low %v594, %v595
    %v642 = vcombine.low %v596, %v597
    %v644 = vunpack.c.l.s4 1983009808
    %v645 = vunpack.c.0.s8 %v644
    %v646 = vlaneseq
    %v647 = vshrl.u32 %v646, 7
    %v648 = vsub.s32 %v645, %v647
    %v649 = vrot.slane %v641, %v648
    %v651 = vunpack.c.l.s4 1983009808
    %v652 = vunpack.c.0.s8 %v651
    %v653 = vlaneseq
    %v654 = vshrl.u32 %v653, 7
    %v655 = vsub.s32 %v652, %v654
    %v656 = vrot.slane %v642, %v655
    %v657 = vcombine.low %v649, %v656
    %v658 = vcombine.low %v598, %v599
    %v660 = vunpack.c.l.s4 1983009808
    %v661 = vunpack.c.0.s8 %v660
    %v662 = vlaneseq
    %v663 = vshrl.u32 %v662, 7
    %v664 = vsub.s32 %v661, %v663
    %v665 = vrot.slane %v658, %v664
    %v668 = vadd.f32 %v633, %v657
    %v669 = vadd.f32 %v634, %v665
    %670 = vrot.lane.b32.xlu0 %v570, 8
    %v671 = vpop.permute.xlu0 %670
    %672 = vrot.lane.b32.xlu0 %v571, 8
    %v673 = vpop.permute.xlu0 %672
    %674 = vrot.lane.b32.xlu0 %v572, 8
    %v675 = vpop.permute.xlu0 %674
    %676 = vrot.lane.b32.xlu0 %v573, 8
    %v677 = vpop.permute.xlu0 %676
    %678 = vrot.lane.b32.xlu0 %v574, 8
    %v679 = vpop.permute.xlu0 %678
    %680 = vrot.lane.b32.xlu0 %v575, 8
    %v681 = vpop.permute.xlu0 %680
    %v682 = vsel %vm90, %v679, %v681
    %v683 = vsel %vm90, %v677, %v679
    %v684 = vsel %vm90, %v675, %v677
    %v685 = vsel %vm90, %v673, %v675
    %v686 = vsel %vm90, %v671, %v673
    %v687 = vsel %vm90, %v681, %v671
    %v688 = vsel %vm33, %v687, %v54
    %v689 = vsel %vm34, %v686, %v62
    %v690 = vsel %vm35, %v685, %v61
    %v691 = vsel %vm36, %v684, %v63
    %v692 = vsel %vm37, %v683, %v70
    %v693 = vsel %vm38, %v682, %v71
    %694 = vrot.lane.b32.xlu0 %v594, 120
    %v695 = vpop.permute.xlu0 %694
    %696 = vrot.lane.b32.xlu0 %v595, 120
    %v697 = vpop.permute.xlu0 %696
    %698 = vrot.lane.b32.xlu0 %v596, 120
    %v699 = vpop.permute.xlu0 %698
    %700 = vrot.lane.b32.xlu0 %v597, 120
    %v701 = vpop.permute.xlu0 %700
    %702 = vrot.lane.b32.xlu0 %v598, 120
    %v703 = vpop.permute.xlu0 %702
    %704 = vrot.lane.b32.xlu0 %v599, 120
    %v705 = vpop.permute.xlu0 %704
    %v706 = vsel %vm115, %v703, %v705
    %v707 = vsel %vm115, %v701, %v703
    %v708 = vsel %vm115, %v699, %v701
    %v709 = vsel %vm115, %v697, %v699
    %v710 = vsel %vm115, %v695, %v697
    %v711 = vsel %vm115, %v705, %v695
    %v712 = vsel %vm39, %v710, %v54
    %v713 = vsel %vm40, %v709, %v62
    %v714 = vsel %vm41, %v708, %v61
    %v715 = vsel %vm42, %v707, %v63
    %v716 = vsel %vm43, %v706, %v70
    %v717 = vsel %vm44, %v711, %v71
    %v724 = vcombine.low %v688, %v689
    %v725 = vcombine.low %v690, %v691
    %v727 = vunpack.c.l.s4 1983009808
    %v728 = vunpack.c.0.s8 %v727
    %v729 = vlaneseq
    %v730 = vshrl.u32 %v729, 7
    %v731 = vsub.s32 %v728, %v730
    %v732 = vrot.slane %v724, %v731
    %v734 = vunpack.c.l.s4 1983009808
    %v735 = vunpack.c.0.s8 %v734
    %v736 = vlaneseq
    %v737 = vshrl.u32 %v736, 7
    %v738 = vsub.s32 %v735, %v737
    %v739 = vrot.slane %v725, %v738
    %v740 = vcombine.low %v732, %v739
    %v741 = vcombine.low %v692, %v693
    %v743 = vunpack.c.l.s4 1983009808
    %v744 = vunpack.c.0.s8 %v743
    %v745 = vlaneseq
    %v746 = vshrl.u32 %v745, 7
    %v747 = vsub.s32 %v744, %v746
    %v748 = vrot.slane %v741, %v747
    %v751 = vadd.f32 %v668, %v740
    %v752 = vadd.f32 %v669, %v748
    %v759 = vcombine.low %v712, %v713
    %v760 = vcombine.low %v714, %v715
    %v762 = vunpack.c.l.s4 1983009808
    %v763 = vunpack.c.0.s8 %v762
    %v764 = vlaneseq
    %v765 = vshrl.u32 %v764, 7
    %v766 = vsub.s32 %v763, %v765
    %v767 = vrot.slane %v759, %v766
    %v769 = vunpack.c.l.s4 1983009808
    %v770 = vunpack.c.0.s8 %v769
    %v771 = vlaneseq
    %v772 = vshrl.u32 %v771, 7
    %v773 = vsub.s32 %v770, %v772
    %v774 = vrot.slane %v760, %v773
    %v775 = vcombine.low %v767, %v774
    %v776 = vcombine.low %v716, %v717
    %v778 = vunpack.c.l.s4 1983009808
    %v779 = vunpack.c.0.s8 %v778
    %v780 = vlaneseq
    %v781 = vshrl.u32 %v780, 7
    %v782 = vsub.s32 %v779, %v781
    %v783 = vrot.slane %v776, %v782
    %v786 = vadd.f32 %v751, %v775
    %v787 = vadd.f32 %v752, %v783
    %788 = vrot.lane.b32.xlu0 %v688, 8
    %v789 = vpop.permute.xlu0 %788
    %790 = vrot.lane.b32.xlu0 %v689, 8
    %v791 = vpop.permute.xlu0 %790
    %792 = vrot.lane.b32.xlu0 %v690, 8
    %v793 = vpop.permute.xlu0 %792
    %794 = vrot.lane.b32.xlu0 %v691, 8
    %v795 = vpop.permute.xlu0 %794
    %796 = vrot.lane.b32.xlu0 %v692, 8
    %v797 = vpop.permute.xlu0 %796
    %798 = vrot.lane.b32.xlu0 %v693, 8
    %v799 = vpop.permute.xlu0 %798
    %v800 = vsel %vm90, %v797, %v799
    %v801 = vsel %vm90, %v795, %v797
    %v802 = vsel %vm90, %v793, %v795
    %v803 = vsel %vm90, %v791, %v793
    %v804 = vsel %vm90, %v789, %v791
    %v805 = vsel %vm90, %v799, %v789
    %v806 = vsel %vm33, %v805, %v54
    %v807 = vsel %vm34, %v804, %v62
    %v808 = vsel %vm35, %v803, %v61
    %v809 = vsel %vm36, %v802, %v63
    %v810 = vsel %vm37, %v801, %v70
    %v811 = vsel %vm38, %v800, %v71
    %812 = vrot.lane.b32.xlu0 %v712, 120
    %v813 = vpop.permute.xlu0 %812
    %814 = vrot.lane.b32.xlu0 %v713, 120
    %v815 = vpop.permute.xlu0 %814
    %816 = vrot.lane.b32.xlu0 %v714, 120
    %v817 = vpop.permute.xlu0 %816
    %818 = vrot.lane.b32.xlu0 %v715, 120
    %v819 = vpop.permute.xlu0 %818
    %820 = vrot.lane.b32.xlu0 %v716, 120
    %v821 = vpop.permute.xlu0 %820
    %822 = vrot.lane.b32.xlu0 %v717, 120
    %v823 = vpop.permute.xlu0 %822
    %v824 = vsel %vm115, %v821, %v823
    %v825 = vsel %vm115, %v819, %v821
    %v826 = vsel %vm115, %v817, %v819
    %v827 = vsel %vm115, %v815, %v817
    %v828 = vsel %vm115, %v813, %v815
    %v829 = vsel %vm115, %v823, %v813
    %v830 = vsel %vm39, %v828, %v54
    %v831 = vsel %vm40, %v827, %v62
    %v832 = vsel %vm41, %v826, %v61
    %v833 = vsel %vm42, %v825, %v63
    %v834 = vsel %vm43, %v824, %v70
    %v835 = vsel %vm44, %v829, %v71
    %v842 = vcombine.low %v806, %v807
    %v843 = vcombine.low %v808, %v809
    %v845 = vunpack.c.l.s4 1983009808
    %v846 = vunpack.c.0.s8 %v845
    %v847 = vlaneseq
    %v848 = vshrl.u32 %v847, 7
    %v849 = vsub.s32 %v846, %v848
    %v850 = vrot.slane %v842, %v849
    %v852 = vunpack.c.l.s4 1983009808
    %v853 = vunpack.c.0.s8 %v852
    %v854 = vlaneseq
    %v855 = vshrl.u32 %v854, 7
    %v856 = vsub.s32 %v853, %v855
    %v857 = vrot.slane %v843, %v856
    %v858 = vcombine.low %v850, %v857
    %v859 = vcombine.low %v810, %v811
    %v861 = vunpack.c.l.s4 1983009808
    %v862 = vunpack.c.0.s8 %v861
    %v863 = vlaneseq
    %v864 = vshrl.u32 %v863, 7
    %v865 = vsub.s32 %v862, %v864
    %v866 = vrot.slane %v859, %v865
    %v869 = vadd.f32 %v786, %v858
    %v870 = vadd.f32 %v787, %v866
    %v877 = vcombine.low %v830, %v831
    %v878 = vcombine.low %v832, %v833
    %v880 = vunpack.c.l.s4 1983009808
    %v881 = vunpack.c.0.s8 %v880
    %v882 = vlaneseq
    %v883 = vshrl.u32 %v882, 7
    %v884 = vsub.s32 %v881, %v883
    %v885 = vrot.slane %v877, %v884
    %v887 = vunpack.c.l.s4 1983009808
    %v888 = vunpack.c.0.s8 %v887
    %v889 = vlaneseq
    %v890 = vshrl.u32 %v889, 7
    %v891 = vsub.s32 %v888, %v890
    %v892 = vrot.slane %v878, %v891
    %v893 = vcombine.low %v885, %v892
    %v894 = vcombine.low %v834, %v835
    %v896 = vunpack.c.l.s4 1983009808
    %v897 = vunpack.c.0.s8 %v896
    %v898 = vlaneseq
    %v899 = vshrl.u32 %v898, 7
    %v900 = vsub.s32 %v897, %v899
    %v901 = vrot.slane %v894, %v900
    %v904 = vadd.f32 %v869, %v893
    %v905 = vadd.f32 %v870, %v901
    %906 = vrot.lane.b32.xlu0 %v806, 8
    %v907 = vpop.permute.xlu0 %906
    %908 = vrot.lane.b32.xlu0 %v807, 8
    %v909 = vpop.permute.xlu0 %908
    %910 = vrot.lane.b32.xlu0 %v808, 8
    %v911 = vpop.permute.xlu0 %910
    %912 = vrot.lane.b32.xlu0 %v809, 8
    %v913 = vpop.permute.xlu0 %912
    %914 = vrot.lane.b32.xlu0 %v810, 8
    %v915 = vpop.permute.xlu0 %914
    %916 = vrot.lane.b32.xlu0 %v811, 8
    %v917 = vpop.permute.xlu0 %916
    %v918 = vsel %vm90, %v915, %v917
    %v919 = vsel %vm90, %v913, %v915
    %v920 = vsel %vm90, %v911, %v913
    %v921 = vsel %vm90, %v909, %v911
    %v922 = vsel %vm90, %v907, %v909
    %v923 = vsel %vm90, %v917, %v907
    %v924 = vsel %vm33, %v923, %v54
    %v925 = vsel %vm34, %v922, %v62
    %v926 = vsel %vm35, %v921, %v61
    %v927 = vsel %vm36, %v920, %v63
    %v928 = vsel %vm37, %v919, %v70
    %v929 = vsel %vm38, %v918, %v71
    %930 = vrot.lane.b32.xlu0 %v830, 120
    %v931 = vpop.permute.xlu0 %930
    %932 = vrot.lane.b32.xlu0 %v831, 120
    %v933 = vpop.permute.xlu0 %932
    %934 = vrot.lane.b32.xlu0 %v832, 120
    %v935 = vpop.permute.xlu0 %934
    %936 = vrot.lane.b32.xlu0 %v833, 120
    %v937 = vpop.permute.xlu0 %936
    %938 = vrot.lane.b32.xlu0 %v834, 120
    %v939 = vpop.permute.xlu0 %938
    %940 = vrot.lane.b32.xlu0 %v835, 120
    %v941 = vpop.permute.xlu0 %940
    %v942 = vsel %vm115, %v939, %v941
    %v943 = vsel %vm115, %v937, %v939
    %v944 = vsel %vm115, %v935, %v937
    %v945 = vsel %vm115, %v933, %v935
    %v946 = vsel %vm115, %v931, %v933
    %v947 = vsel %vm115, %v941, %v931
    %v948 = vsel %vm39, %v946, %v54
    %v949 = vsel %vm40, %v945, %v62
    %v950 = vsel %vm41, %v944, %v61
    %v951 = vsel %vm42, %v943, %v63
    %v952 = vsel %vm43, %v942, %v70
    %v953 = vsel %vm44, %v947, %v71
    %v960 = vcombine.low %v924, %v925
    %v961 = vcombine.low %v926, %v927
    %v963 = vunpack.c.l.s4 1983009808
    %v964 = vunpack.c.0.s8 %v963
    %v965 = vlaneseq
    %v966 = vshrl.u32 %v965, 7
    %v967 = vsub.s32 %v964, %v966
    %v968 = vrot.slane %v960, %v967
    %v970 = vunpack.c.l.s4 1983009808
    %v971 = vunpack.c.0.s8 %v970
    %v972 = vlaneseq
    %v973 = vshrl.u32 %v972, 7
    %v974 = vsub.s32 %v971, %v973
    %v975 = vrot.slane %v961, %v974
    %v976 = vcombine.low %v968, %v975
    %v977 = vcombine.low %v928, %v929
    %v979 = vunpack.c.l.s4 1983009808
    %v980 = vunpack.c.0.s8 %v979
    %v981 = vlaneseq
    %v982 = vshrl.u32 %v981, 7
    %v983 = vsub.s32 %v980, %v982
    %v984 = vrot.slane %v977, %v983
    %v987 = vadd.f32 %v904, %v976
    %v988 = vadd.f32 %v905, %v984
    %v995 = vcombine.low %v948, %v949
    %v996 = vcombine.low %v950, %v951
    %v998 = vunpack.c.l.s4 1983009808
    %v999 = vunpack.c.0.s8 %v998
    %v1000 = vlaneseq
    %v1001 = vshrl.u32 %v1000, 7
    %v1002 = vsub.s32 %v999, %v1001
    %v1003 = vrot.slane %v995, %v1002
    %v1005 = vunpack.c.l.s4 1983009808
    %v1006 = vunpack.c.0.s8 %v1005
    %v1007 = vlaneseq
    %v1008 = vshrl.u32 %v1007, 7
    %v1009 = vsub.s32 %v1006, %v1008
    %v1010 = vrot.slane %v996, %v1009
    %v1011 = vcombine.low %v1003, %v1010
    %v1012 = vcombine.low %v952, %v953
    %v1014 = vunpack.c.l.s4 1983009808
    %v1015 = vunpack.c.0.s8 %v1014
    %v1016 = vlaneseq
    %v1017 = vshrl.u32 %v1016, 7
    %v1018 = vsub.s32 %v1015, %v1017
    %v1019 = vrot.slane %v1012, %v1018
    %v1022 = vadd.f32 %v987, %v1011
    %v1023 = vadd.f32 %v988, %v1019
    %1024 = vrot.lane.b32.xlu0 %v924, 8
    %v1025 = vpop.permute.xlu0 %1024
    %1026 = vrot.lane.b32.xlu0 %v925, 8
    %v1027 = vpop.permute.xlu0 %1026
    %1028 = vrot.lane.b32.xlu0 %v926, 8
    %v1029 = vpop.permute.xlu0 %1028
    %1030 = vrot.lane.b32.xlu0 %v927, 8
    %v1031 = vpop.permute.xlu0 %1030
    %1032 = vrot.lane.b32.xlu0 %v928, 8
    %v1033 = vpop.permute.xlu0 %1032
    %1034 = vrot.lane.b32.xlu0 %v929, 8
    %v1035 = vpop.permute.xlu0 %1034
    %v1036 = vsel %vm90, %v1033, %v1035
    %v1037 = vsel %vm90, %v1031, %v1033
    %v1038 = vsel %vm90, %v1029, %v1031
    %v1039 = vsel %vm90, %v1027, %v1029
    %v1040 = vsel %vm90, %v1025, %v1027
    %v1041 = vsel %vm90, %v1035, %v1025
    %v1042 = vsel %vm33, %v1041, %v54
    %v1043 = vsel %vm34, %v1040, %v62
    %v1044 = vsel %vm35, %v1039, %v61
    %v1045 = vsel %vm36, %v1038, %v63
    %v1046 = vsel %vm37, %v1037, %v70
    %v1047 = vsel %vm38, %v1036, %v71
    %1048 = vrot.lane.b32.xlu0 %v948, 120
    %v1049 = vpop.permute.xlu0 %1048
    %1050 = vrot.lane.b32.xlu0 %v949, 120
    %v1051 = vpop.permute.xlu0 %1050
    %1052 = vrot.lane.b32.xlu0 %v950, 120
    %v1053 = vpop.permute.xlu0 %1052
    %1054 = vrot.lane.b32.xlu0 %v951, 120
    %v1055 = vpop.permute.xlu0 %1054
    %1056 = vrot.lane.b32.xlu0 %v952, 120
    %v1057 = vpop.permute.xlu0 %1056
    %1058 = vrot.lane.b32.xlu0 %v953, 120
    %v1059 = vpop.permute.xlu0 %1058
    %v1060 = vsel %vm115, %v1057, %v1059
    %v1061 = vsel %vm115, %v1055, %v1057
    %v1062 = vsel %vm115, %v1053, %v1055
    %v1063 = vsel %vm115, %v1051, %v1053
    %v1064 = vsel %vm115, %v1049, %v1051
    %v1065 = vsel %vm115, %v1059, %v1049
    %v1066 = vsel %vm39, %v1064, %v54
    %v1067 = vsel %vm40, %v1063, %v62
    %v1068 = vsel %vm41, %v1062, %v61
    %v1069 = vsel %vm42, %v1061, %v63
    %v1070 = vsel %vm43, %v1060, %v70
    %v1071 = vsel %vm44, %v1065, %v71
    %v1078 = vcombine.low %v1042, %v1043
    %v1079 = vcombine.low %v1044, %v1045
    %v1081 = vunpack.c.l.s4 1983009808
    %v1082 = vunpack.c.0.s8 %v1081
    %v1083 = vlaneseq
    %v1084 = vshrl.u32 %v1083, 7
    %v1085 = vsub.s32 %v1082, %v1084
    %v1086 = vrot.slane %v1078, %v1085
    %v1088 = vunpack.c.l.s4 1983009808
    %v1089 = vunpack.c.0.s8 %v1088
    %v1090 = vlaneseq
    %v1091 = vshrl.u32 %v1090, 7
    %v1092 = vsub.s32 %v1089, %v1091
    %v1093 = vrot.slane %v1079, %v1092
    %v1094 = vcombine.low %v1086, %v1093
    %v1095 = vcombine.low %v1046, %v1047
    %v1097 = vunpack.c.l.s4 1983009808
    %v1098 = vunpack.c.0.s8 %v1097
    %v1099 = vlaneseq
    %v1100 = vshrl.u32 %v1099, 7
    %v1101 = vsub.s32 %v1098, %v1100
    %v1102 = vrot.slane %v1095, %v1101
    %v1105 = vadd.f32 %v1022, %v1094
    %v1106 = vadd.f32 %v1023, %v1102
    %v1113 = vcombine.low %v1066, %v1067
    %v1114 = vcombine.low %v1068, %v1069
    %v1116 = vunpack.c.l.s4 1983009808
    %v1117 = vunpack.c.0.s8 %v1116
    %v1118 = vlaneseq
    %v1119 = vshrl.u32 %v1118, 7
    %v1120 = vsub.s32 %v1117, %v1119
    %v1121 = vrot.slane %v1113, %v1120
    %v1123 = vunpack.c.l.s4 1983009808
    %v1124 = vunpack.c.0.s8 %v1123
    %v1125 = vlaneseq
    %v1126 = vshrl.u32 %v1125, 7
    %v1127 = vsub.s32 %v1124, %v1126
    %v1128 = vrot.slane %v1114, %v1127
    %v1129 = vcombine.low %v1121, %v1128
    %v1130 = vcombine.low %v1070, %v1071
    %v1132 = vunpack.c.l.s4 1983009808
    %v1133 = vunpack.c.0.s8 %v1132
    %v1134 = vlaneseq
    %v1135 = vshrl.u32 %v1134, 7
    %v1136 = vsub.s32 %v1133, %v1135
    %v1137 = vrot.slane %v1130, %v1136
    %v1140 = vadd.f32 %v1105, %v1129
    %v1141 = vadd.f32 %v1106, %v1137
    %1142 = vrot.lane.b32.xlu0 %v1042, 8
    %v1143 = vpop.permute.xlu0 %1142
    %1144 = vrot.lane.b32.xlu0 %v1043, 8
    %v1145 = vpop.permute.xlu0 %1144
    %1146 = vrot.lane.b32.xlu0 %v1044, 8
    %v1147 = vpop.permute.xlu0 %1146
    %1148 = vrot.lane.b32.xlu0 %v1045, 8
    %v1149 = vpop.permute.xlu0 %1148
    %1150 = vrot.lane.b32.xlu0 %v1046, 8
    %v1151 = vpop.permute.xlu0 %1150
    %1152 = vrot.lane.b32.xlu0 %v1047, 8
    %v1153 = vpop.permute.xlu0 %1152
    %v1154 = vsel %vm90, %v1151, %v1153
    %v1155 = vsel %vm90, %v1149, %v1151
    %v1156 = vsel %vm90, %v1147, %v1149
    %v1157 = vsel %vm90, %v1145, %v1147
    %v1158 = vsel %vm90, %v1143, %v1145
    %v1159 = vsel %vm90, %v1153, %v1143
    %v1160 = vsel %vm33, %v1159, %v54
    %v1161 = vsel %vm34, %v1158, %v62
    %v1162 = vsel %vm35, %v1157, %v61
    %v1163 = vsel %vm36, %v1156, %v63
    %v1164 = vsel %vm37, %v1155, %v70
    %v1165 = vsel %vm38, %v1154, %v71
    %1166 = vrot.lane.b32.xlu0 %v1066, 120
    %v1167 = vpop.permute.xlu0 %1166
    %1168 = vrot.lane.b32.xlu0 %v1067, 120
    %v1169 = vpop.permute.xlu0 %1168
    %1170 = vrot.lane.b32.xlu0 %v1068, 120
    %v1171 = vpop.permute.xlu0 %1170
    %1172 = vrot.lane.b32.xlu0 %v1069, 120
    %v1173 = vpop.permute.xlu0 %1172
    %1174 = vrot.lane.b32.xlu0 %v1070, 120
    %v1175 = vpop.permute.xlu0 %1174
    %1176 = vrot.lane.b32.xlu0 %v1071, 120
    %v1177 = vpop.permute.xlu0 %1176
    %v1178 = vsel %vm115, %v1175, %v1177
    %v1179 = vsel %vm115, %v1173, %v1175
    %v1180 = vsel %vm115, %v1171, %v1173
    %v1181 = vsel %vm115, %v1169, %v1171
    %v1182 = vsel %vm115, %v1167, %v1169
    %v1183 = vsel %vm115, %v1177, %v1167
    %v1184 = vsel %vm39, %v1182, %v54
    %v1185 = vsel %vm40, %v1181, %v62
    %v1186 = vsel %vm41, %v1180, %v61
    %v1187 = vsel %vm42, %v1179, %v63
    %v1188 = vsel %vm43, %v1178, %v70
    %v1189 = vsel %vm44, %v1183, %v71
    %v1196 = vcombine.low %v1160, %v1161
    %v1197 = vcombine.low %v1162, %v1163
    %v1199 = vunpack.c.l.s4 1983009808
    %v1200 = vunpack.c.0.s8 %v1199
    %v1201 = vlaneseq
    %v1202 = vshrl.u32 %v1201, 7
    %v1203 = vsub.s32 %v1200, %v1202
    %v1204 = vrot.slane %v1196, %v1203
    %v1206 = vunpack.c.l.s4 1983009808
    %v1207 = vunpack.c.0.s8 %v1206
    %v1208 = vlaneseq
    %v1209 = vshrl.u32 %v1208, 7
    %v1210 = vsub.s32 %v1207, %v1209
    %v1211 = vrot.slane %v1197, %v1210
    %v1212 = vcombine.low %v1204, %v1211
    %v1213 = vcombine.low %v1164, %v1165
    %v1215 = vunpack.c.l.s4 1983009808
    %v1216 = vunpack.c.0.s8 %v1215
    %v1217 = vlaneseq
    %v1218 = vshrl.u32 %v1217, 7
    %v1219 = vsub.s32 %v1216, %v1218
    %v1220 = vrot.slane %v1213, %v1219
    %v1223 = vadd.f32 %v1140, %v1212
    %v1224 = vadd.f32 %v1141, %v1220
    %v1231 = vcombine.low %v1184, %v1185
    %v1232 = vcombine.low %v1186, %v1187
    %v1234 = vunpack.c.l.s4 1983009808
    %v1235 = vunpack.c.0.s8 %v1234
    %v1236 = vlaneseq
    %v1237 = vshrl.u32 %v1236, 7
    %v1238 = vsub.s32 %v1235, %v1237
    %v1239 = vrot.slane %v1231, %v1238
    %v1241 = vunpack.c.l.s4 1983009808
    %v1242 = vunpack.c.0.s8 %v1241
    %v1243 = vlaneseq
    %v1244 = vshrl.u32 %v1243, 7
    %v1245 = vsub.s32 %v1242, %v1244
    %v1246 = vrot.slane %v1232, %v1245
    %v1247 = vcombine.low %v1239, %v1246
    %v1248 = vcombine.low %v1188, %v1189
    %v1250 = vunpack.c.l.s4 1983009808
    %v1251 = vunpack.c.0.s8 %v1250
    %v1252 = vlaneseq
    %v1253 = vshrl.u32 %v1252, 7
    %v1254 = vsub.s32 %v1251, %v1253
    %v1255 = vrot.slane %v1248, %v1254
    %v1258 = vadd.f32 %v1223, %v1247
    %v1259 = vadd.f32 %v1224, %v1255
    %1260 = vrot.lane.b32.xlu0 %v1160, 8
    %v1261 = vpop.permute.xlu0 %1260
    %1262 = vrot.lane.b32.xlu0 %v1161, 8
    %v1263 = vpop.permute.xlu0 %1262
    %1264 = vrot.lane.b32.xlu0 %v1162, 8
    %v1265 = vpop.permute.xlu0 %1264
    %1266 = vrot.lane.b32.xlu0 %v1163, 8
    %v1267 = vpop.permute.xlu0 %1266
    %1268 = vrot.lane.b32.xlu0 %v1164, 8
    %v1269 = vpop.permute.xlu0 %1268
    %1270 = vrot.lane.b32.xlu0 %v1165, 8
    %v1271 = vpop.permute.xlu0 %1270
    %v1272 = vsel %vm90, %v1269, %v1271
    %v1273 = vsel %vm90, %v1267, %v1269
    %v1274 = vsel %vm90, %v1265, %v1267
    %v1275 = vsel %vm90, %v1263, %v1265
    %v1276 = vsel %vm90, %v1261, %v1263
    %v1277 = vsel %vm90, %v1271, %v1261
    %v1278 = vsel %vm33, %v1277, %v54
    %v1279 = vsel %vm34, %v1276, %v62
    %v1280 = vsel %vm35, %v1275, %v61
    %v1281 = vsel %vm36, %v1274, %v63
    %v1282 = vsel %vm37, %v1273, %v70
    %v1283 = vsel %vm38, %v1272, %v71
    %1284 = vrot.lane.b32.xlu0 %v1184, 120
    %v1285 = vpop.permute.xlu0 %1284
    %1286 = vrot.lane.b32.xlu0 %v1185, 120
    %v1287 = vpop.permute.xlu0 %1286
    %1288 = vrot.lane.b32.xlu0 %v1186, 120
    %v1289 = vpop.permute.xlu0 %1288
    %1290 = vrot.lane.b32.xlu0 %v1187, 120
    %v1291 = vpop.permute.xlu0 %1290
    %1292 = vrot.lane.b32.xlu0 %v1188, 120
    %v1293 = vpop.permute.xlu0 %1292
    %1294 = vrot.lane.b32.xlu0 %v1189, 120
    %v1295 = vpop.permute.xlu0 %1294
    %v1296 = vsel %vm115, %v1293, %v1295
    %v1297 = vsel %vm115, %v1291, %v1293
    %v1298 = vsel %vm115, %v1289, %v1291
    %v1299 = vsel %vm115, %v1287, %v1289
    %v1300 = vsel %vm115, %v1285, %v1287
    %v1301 = vsel %vm115, %v1295, %v1285
    %v1302 = vsel %vm39, %v1300, %v54
    %v1303 = vsel %vm40, %v1299, %v62
    %v1304 = vsel %vm41, %v1298, %v61
    %v1305 = vsel %vm42, %v1297, %v63
    %v1306 = vsel %vm43, %v1296, %v70
    %v1307 = vsel %vm44, %v1301, %v71
    %v1314 = vcombine.low %v1278, %v1279
    %v1315 = vcombine.low %v1280, %v1281
    %v1317 = vunpack.c.l.s4 1983009808
    %v1318 = vunpack.c.0.s8 %v1317
    %v1319 = vlaneseq
    %v1320 = vshrl.u32 %v1319, 7
    %v1321 = vsub.s32 %v1318, %v1320
    %v1322 = vrot.slane %v1314, %v1321
    %v1324 = vunpack.c.l.s4 1983009808
    %v1325 = vunpack.c.0.s8 %v1324
    %v1326 = vlaneseq
    %v1327 = vshrl.u32 %v1326, 7
    %v1328 = vsub.s32 %v1325, %v1327
    %v1329 = vrot.slane %v1315, %v1328
    %v1330 = vcombine.low %v1322, %v1329
    %v1331 = vcombine.low %v1282, %v1283
    %v1333 = vunpack.c.l.s4 1983009808
    %v1334 = vunpack.c.0.s8 %v1333
    %v1335 = vlaneseq
    %v1336 = vshrl.u32 %v1335, 7
    %v1337 = vsub.s32 %v1334, %v1336
    %v1338 = vrot.slane %v1331, %v1337
    %v1341 = vadd.f32 %v1258, %v1330
    %v1342 = vadd.f32 %v1259, %v1338
    %v1349 = vcombine.low %v1302, %v1303
    %v1350 = vcombine.low %v1304, %v1305
    %v1352 = vunpack.c.l.s4 1983009808
    %v1353 = vunpack.c.0.s8 %v1352
    %v1354 = vlaneseq
    %v1355 = vshrl.u32 %v1354, 7
    %v1356 = vsub.s32 %v1353, %v1355
    %v1357 = vrot.slane %v1349, %v1356
    %v1359 = vunpack.c.l.s4 1983009808
    %v1360 = vunpack.c.0.s8 %v1359
    %v1361 = vlaneseq
    %v1362 = vshrl.u32 %v1361, 7
    %v1363 = vsub.s32 %v1360, %v1362
    %v1364 = vrot.slane %v1350, %v1363
    %v1365 = vcombine.low %v1357, %v1364
    %v1366 = vcombine.low %v1306, %v1307
    %v1368 = vunpack.c.l.s4 1983009808
    %v1369 = vunpack.c.0.s8 %v1368
    %v1370 = vlaneseq
    %v1371 = vshrl.u32 %v1370, 7
    %v1372 = vsub.s32 %v1369, %v1371
    %v1373 = vrot.slane %v1366, %v1372
    %v1376 = vadd.f32 %v1341, %v1365
    %v1377 = vadd.f32 %v1342, %v1373
    %1378 = vrot.lane.b32.xlu0 %v1278, 8
    %v1379 = vpop.permute.xlu0 %1378
    %1380 = vrot.lane.b32.xlu0 %v1279, 8
    %v1381 = vpop.permute.xlu0 %1380
    %1382 = vrot.lane.b32.xlu0 %v1280, 8
    %v1383 = vpop.permute.xlu0 %1382
    %1384 = vrot.lane.b32.xlu0 %v1281, 8
    %v1385 = vpop.permute.xlu0 %1384
    %1386 = vrot.lane.b32.xlu0 %v1282, 8
    %v1387 = vpop.permute.xlu0 %1386
    %1388 = vrot.lane.b32.xlu0 %v1283, 8
    %v1389 = vpop.permute.xlu0 %1388
    %v1390 = vsel %vm90, %v1387, %v1389
    %v1391 = vsel %vm90, %v1385, %v1387
    %v1392 = vsel %vm90, %v1383, %v1385
    %v1393 = vsel %vm90, %v1381, %v1383
    %v1394 = vsel %vm90, %v1379, %v1381
    %v1395 = vsel %vm90, %v1389, %v1379
    %v1396 = vsel %vm33, %v1395, %v54
    %v1397 = vsel %vm34, %v1394, %v62
    %v1398 = vsel %vm35, %v1393, %v61
    %v1399 = vsel %vm36, %v1392, %v63
    %v1400 = vsel %vm37, %v1391, %v70
    %v1401 = vsel %vm38, %v1390, %v71
    %1402 = vrot.lane.b32.xlu0 %v1302, 120
    %v1403 = vpop.permute.xlu0 %1402
    %1404 = vrot.lane.b32.xlu0 %v1303, 120
    %v1405 = vpop.permute.xlu0 %1404
    %1406 = vrot.lane.b32.xlu0 %v1304, 120
    %v1407 = vpop.permute.xlu0 %1406
    %1408 = vrot.lane.b32.xlu0 %v1305, 120
    %v1409 = vpop.permute.xlu0 %1408
    %1410 = vrot.lane.b32.xlu0 %v1306, 120
    %v1411 = vpop.permute.xlu0 %1410
    %1412 = vrot.lane.b32.xlu0 %v1307, 120
    %v1413 = vpop.permute.xlu0 %1412
    %v1414 = vsel %vm115, %v1411, %v1413
    %v1415 = vsel %vm115, %v1409, %v1411
    %v1416 = vsel %vm115, %v1407, %v1409
    %v1417 = vsel %vm115, %v1405, %v1407
    %v1418 = vsel %vm115, %v1403, %v1405
    %v1419 = vsel %vm115, %v1413, %v1403
    %v1420 = vsel %vm39, %v1418, %v54
    %v1421 = vsel %vm40, %v1417, %v62
    %v1422 = vsel %vm41, %v1416, %v61
    %v1423 = vsel %vm42, %v1415, %v63
    %v1424 = vsel %vm43, %v1414, %v70
    %v1425 = vsel %vm44, %v1419, %v71
    %v1432 = vcombine.low %v1396, %v1397
    %v1433 = vcombine.low %v1398, %v1399
    %v1435 = vunpack.c.l.s4 1983009808
    %v1436 = vunpack.c.0.s8 %v1435
    %v1437 = vlaneseq
    %v1438 = vshrl.u32 %v1437, 7
    %v1439 = vsub.s32 %v1436, %v1438
    %v1440 = vrot.slane %v1432, %v1439
    %v1442 = vunpack.c.l.s4 1983009808
    %v1443 = vunpack.c.0.s8 %v1442
    %v1444 = vlaneseq
    %v1445 = vshrl.u32 %v1444, 7
    %v1446 = vsub.s32 %v1443, %v1445
    %v1447 = vrot.slane %v1433, %v1446
    %v1448 = vcombine.low %v1440, %v1447
    %v1449 = vcombine.low %v1400, %v1401
    %v1451 = vunpack.c.l.s4 1983009808
    %v1452 = vunpack.c.0.s8 %v1451
    %v1453 = vlaneseq
    %v1454 = vshrl.u32 %v1453, 7
    %v1455 = vsub.s32 %v1452, %v1454
    %v1456 = vrot.slane %v1449, %v1455
    %v1459 = vadd.f32 %v1376, %v1448
    %v1460 = vadd.f32 %v1377, %v1456
    %v1467 = vcombine.low %v1420, %v1421
    %v1468 = vcombine.low %v1422, %v1423
    %v1470 = vunpack.c.l.s4 1983009808
    %v1471 = vunpack.c.0.s8 %v1470
    %v1472 = vlaneseq
    %v1473 = vshrl.u32 %v1472, 7
    %v1474 = vsub.s32 %v1471, %v1473
    %v1475 = vrot.slane %v1467, %v1474
    %v1477 = vunpack.c.l.s4 1983009808
    %v1478 = vunpack.c.0.s8 %v1477
    %v1479 = vlaneseq
    %v1480 = vshrl.u32 %v1479, 7
    %v1481 = vsub.s32 %v1478, %v1480
    %v1482 = vrot.slane %v1468, %v1481
    %v1483 = vcombine.low %v1475, %v1482
    %v1484 = vcombine.low %v1424, %v1425
    %v1486 = vunpack.c.l.s4 1983009808
    %v1487 = vunpack.c.0.s8 %v1486
    %v1488 = vlaneseq
    %v1489 = vshrl.u32 %v1488, 7
    %v1490 = vsub.s32 %v1487, %v1489
    %v1491 = vrot.slane %v1484, %v1490
    %v1494 = vadd.f32 %v1459, %v1483
    %v1495 = vadd.f32 %v1460, %v1491
    %v1496 = vmul.f32 %v1494, 0.04
    %v1497 = vmul.f32 %v1495, 0.04
    %1498 = vst [vmem:[#allocation6] sm:$0xff] %v1496
    %1499 = vst [vmem:[#allocation6 + $0x8] sm:$0xf] %v1497
    %v1500 = vsub.f32 %v24, %v1496
    %v1501 = vsub.f32 %v25, %v1497
    %1502 = vst [vmem:[#allocation5] sm:$0xff] %v1500
    %1503 = vst [vmem:[#allocation5 + $0x8] sm:$0xf] %v1501
    // Predicated region
    $region10: #{tpu_custom_call.1} parent=1 // pred_check
      _
    $region11: #{tpu_custom_call.1} parent=1 // pred_check_branch
      %1505 = sbr.rel (0) target = $region13
    $region12: #{tpu_custom_call.1} parent=1 // pred_region
      %s1507 = ssub.s32 192, 192
      %1508 = vsyncadd [#allocation4], %s1507
      %s1510 = sshll.u32 [#allocation5], 4
      %s1511 = int_to_ptr.vmem [resolvable:$true] %s1510
      %1513 = dma.vmem_to_hbm [thread:$0]  %s1511, 192, %s1, [#allocation4]
    $region13: #{tpu_custom_call.1} parent=1 // pred_fallthru
      _
    // Predicated region
    $region14: #{tpu_custom_call.1} parent=1 // pred_check
      _
    $region15: #{tpu_custom_call.1} parent=1 // pred_check_branch
      %1515 = sbr.rel (0) target = $region17
    $region16: #{tpu_custom_call.1} parent=1 // pred_region
      %s1517 = ssub.s32 192, 192
      %1518 = vsyncadd [#allocation7], %s1517
      %s1520 = sshll.u32 [#allocation6], 4
      %s1521 = int_to_ptr.vmem [resolvable:$true] %s1520
      %1523 = dma.vmem_to_hbm [thread:$0]  %s1521, 192, %s2, [#allocation7]
    $region17: #{tpu_custom_call.1} parent=1 // pred_fallthru
      _
    // Predicated region
    $region18: #{tpu_custom_call.1} parent=1 // pred_check
      _
    $region19: #{tpu_custom_call.1} parent=1 // pred_check_branch
      %1525 = sbr.rel (0) target = $region21
    $region20: #{tpu_custom_call.1} parent=1 // pred_region
      %1526 = dma.done [#allocation4], 192
    $region21: #{tpu_custom_call.1} parent=1 // pred_fallthru
      _
    // Predicated region
    $region22: #{tpu_custom_call.1} parent=1 // pred_check
      _
    $region23: #{tpu_custom_call.1} parent=1 // pred_check_branch
      %1528 = sbr.rel (0) target = $region25
    $region24: #{tpu_custom_call.1} parent=1 // pred_region
      %1529 = dma.done [#allocation7], 192
    $region25: #{tpu_custom_call.1} parent=1 // pred_fallthru
      _
    %1530 = vsyncpa [#allocation3], 1
    %1531 = vsyncpa [#allocation4], 1
    %1532 = vsyncpa [#allocation7], 1

</llo_original>
